<compile_context>
chip_gen: v5e
topology: v5e:2x2
jax: 0.10.0
libtpu: 0.0.40
codegen_flags: <defaults>
</compile_context>

<pallas_src>
import functools

import jax
import jax.numpy as jnp
from jax.experimental import pallas as pl
from jax.experimental.pallas import tpu as pltpu


_BLOCK_BUDGET_BYTES = 2 * 1024 * 1024   # per (TB, L, TC) f32 block
_MAX_UNROLL = 16                        # cap on the in-kernel batch unroll


# ----------------------------------------------------------------------------
# Kernel
# ----------------------------------------------------------------------------
def _series_decomp_kernel(a_ref, x_ref, res_ref, mean_ref):
    """a_ref: (L, L) f32 averaging matrix; x/res/mean refs: (TB, L, TC)."""
    a = a_ref[...]                      # (L, L) f32; block index is constant
    tb = x_ref.shape[0]
    for b in range(tb):                 # static unroll, tb <= _MAX_UNROLL
        xb = x_ref[b].astype(jnp.float32)                       # (L, TC)
        mb = jnp.dot(a, xb,
                     preferred_element_type=jnp.float32,
                     precision=jax.lax.Precision.HIGHEST)       # MXU matmul
        mean_ref[b] = mb.astype(mean_ref.dtype)
        res_ref[b] = (xb - mb).astype(res_ref.dtype)


# ----------------------------------------------------------------------------
# Banded averaging matrix (replicate padding folded into edge columns)
# ----------------------------------------------------------------------------
def _build_avg_matrix(seq_len: int, kernel_size: int) -> jax.Array:
    pad = (kernel_size - 1) // 2
    idx = jnp.arange(seq_len, dtype=jnp.int32)
    # In-range band: |t - m| <= pad contributes weight 1.
    band = (jnp.abs(idx[:, None] - idx[None, :]) <= pad).astype(jnp.float32)
    # Replicate padding: indices clipped to 0 / L-1 add extra weight to the
    # first / last column.
    front = jnp.maximum(pad - idx, 0).astype(jnp.float32)
    back = jnp.maximum(idx + pad - (seq_len - 1), 0).astype(jnp.float32)
    a = band.at[:, 0].add(front)
    a = a.at[:, seq_len - 1].add(back)
    return a * (1.0 / kernel_size)


# ----------------------------------------------------------------------------
# Wrapper
# ----------------------------------------------------------------------------
def _largest_divisor_leq(n: int, cap: int) -> int:
    cap = max(1, min(n, cap))
    for d in range(cap, 0, -1):
        if n % d == 0:
            return d
    return 1


def _choose_channel_tile(L: int, C: int) -> int:
    # Prefer TC == C: fully contiguous (L, C) row DMAs and the fewest grid steps.
    if C % 128 != 0 or L * C * 4 <= _BLOCK_BUDGET_BYTES:
        return C
    # Only tile channels (lane-dense multiples of 128) when one row is too big.
    best, d = 128, 128
    while d <= C:
        if C % d == 0 and L * d * 4 <= _BLOCK_BUDGET_BYTES:
            best = d
        d += 128
    return best


def series_decomp(x: jax.Array, kernel_size: int):
    """x: (B, L, C) -> (res, moving_mean), both (B, L, C)."""
    assert kernel_size >= 1 and kernel_size % 2 == 1, (
        "SeriesDecomp with stride=1 requires an odd kernel_size "
        "(the PyTorch original otherwise produces mismatched shapes).")
    B, L, C = x.shape

    TC = _choose_channel_tile(L, C)
    bytes_per_row = max(1, L * TC * 4)
    tb_cap = max(1, _BLOCK_BUDGET_BYTES // bytes_per_row)
    TB = _largest_divisor_leq(B, min(tb_cap, _MAX_UNROLL))
    # v7x megacore: guarantee >= 2 grid steps along a parallel axis when possible.
    if (B // TB) * (C // TC) < 2 and B > 1:
        TB = _largest_divisor_leq(B, B // 2)

    grid = (B // TB, C // TC)
    a_mat = _build_avg_matrix(L, kernel_size)

    res, mean = pl.pallas_call(
        _series_decomp_kernel,
        out_shape=(
            jax.ShapeDtypeStruct((B, L, C), x.dtype),
            jax.ShapeDtypeStruct((B, L, C), x.dtype),
        ),
        grid_spec=pltpu.PrefetchScalarGridSpec(
            num_scalar_prefetch=0,
            grid=grid,
            in_specs=[
                pl.BlockSpec((L, L), lambda i, j: (0, 0)),           # A (fetched once)
                pl.BlockSpec((TB, L, TC), lambda i, j: (i, 0, j)),   # x
            ],
            out_specs=[
                pl.BlockSpec((TB, L, TC), lambda i, j: (i, 0, j)),   # res
                pl.BlockSpec((TB, L, TC), lambda i, j: (i, 0, j)),   # moving_mean
            ],
        ),
        compiler_params=pltpu.CompilerParams(
            dimension_semantics=("parallel", "parallel"),
            vmem_limit_bytes=32 * 1024 * 1024,
        ),
    )(a_mat, x)
    return res, mean


# ----------------------------------------------------------------------------
# Pure-JAX reference (mirrors the PyTorch module exactly)
# ----------------------------------------------------------------------------
def series_decomp_ref(x: jax.Array, kernel_size: int):
    pad = (kernel_size - 1) // 2
    front = jnp.repeat(x[:, :1, :], pad, axis=1)
    end = jnp.repeat(x[:, -1:, :], pad, axis=1)
    xp = jnp.concatenate([front, x, end], axis=1)
    L = x.shape[1]
    windows = jnp.stack([xp[:, j:j + L, :] for j in range(kernel_size)], axis=0)
    mean = jnp.mean(windows, axis=0)
    return x - mean, mean


# ----------------------------------------------------------------------------
# Demo / self-test
# ----------------------------------------------------------------------------
if __name__ == "__main__":
    key = jax.random.PRNGKey(0)

    configs = [
        # (B, L, C, kernel_size)
        (2, 16, 32, 5),     # tiny; TC == C (C not a multiple of 128)
        (4, 24, 256, 25),   # Autoformer-like k; contiguous TC == C = 256 path
        (3, 36, 7, 25),     # small channel count; heavy edge-padding region
    ]

    ok = True
    for (B, L, C, k) in configs:
        key, sub = jax.random.split(key)
        x = jax.random.normal(sub, (B, L, C), jnp.float32)

        fwd = jax.jit(functools.partial(series_decomp, kernel_size=k))
        res, mean = fwd(x)
        res = jax.block_until_ready(res)
        mean = jax.block_until_ready(mean)

        res_ref, mean_ref = series_decomp_ref(x, k)

        ok &= res.shape == (B, L, C) and mean.shape == (B, L, C)
        ok &= bool(jnp.all(jnp.isfinite(res)) & jnp.all(jnp.isfinite(mean)))
        ok &= bool(jnp.allclose(mean, mean_ref, atol=1e-5, rtol=1e-5))
        ok &= bool(jnp.allclose(res, res_ref, atol=1e-5, rtol=1e-5))
        ok &= bool(jnp.allclose(res + mean, x, atol=1e-5, rtol=1e-5))

    if ok:
        print("KERNEL_OK")
    else:
        print("KERNEL_MISMATCH")
</pallas_src>

<mosaic_0001>
module attributes {stable_mosaic.version = 11 : i64} {
  func.func @_series_decomp_kernel(%arg0: i32, %arg1: i32, %arg2: memref<16x16xf32, #tpu.memory_space<vmem>>, %arg3: memref<1x16x32xf32, #tpu.memory_space<vmem>>, %arg4: memref<1x16x32xf32, #tpu.memory_space<vmem>>, %arg5: memref<1x16x32xf32, #tpu.memory_space<vmem>>) attributes {dimension_semantics = [#tpu.dimension_semantics<parallel>, #tpu.dimension_semantics<parallel>], iteration_bounds = array<i64: 2, 1>, scalar_prefetch = 0 : i64, scratch_operands = 0 : i64, tpu.core_type = #tpu.core_type<tc>, window_params = [{pipeline_mode = #tpu.pipeline_mode<synchronous>, transform_indices = @transform_0, window_bounds = array<i64: 16, 16>}, {transform_indices = @transform_1, window_bounds = array<i64: 1, 16, 32>}, {transform_indices = @transform_2, window_bounds = array<i64: 1, 16, 32>}, {transform_indices = @transform_3, window_bounds = array<i64: 1, 16, 32>}]} {
    %c0 = arith.constant 0 : index
    %c0_0 = arith.constant 0 : index
    %0 = vector.load %arg2[%c0, %c0_0] : memref<16x16xf32, #tpu.memory_space<vmem>>, vector<16x16xf32>
    %c0_1 = arith.constant 0 : index
    %c0_2 = arith.constant 0 : index
    %c0_3 = arith.constant 0 : index
    %1 = vector.load %arg3[%c0_1, %c0_2, %c0_3] : memref<1x16x32xf32, #tpu.memory_space<vmem>>, vector<1x16x32xf32>
    %2 = vector.shape_cast %1 : vector<1x16x32xf32> to vector<16x32xf32>
    %cst = arith.constant dense<0.000000e+00> : vector<16x32xf32>
    %3 = tpu.matmul %0, %2, %cst {dimension_numbers = #tpu.dot_dimension_numbers<[1], [0], [0], [1], [0, 0, 1, 1], [], []>, precision = #tpu.contract_precision<fp32>} : vector<16x16xf32>, vector<16x32xf32>, vector<16x32xf32> -> vector<16x32xf32>
    %c0_4 = arith.constant 0 : index
    %c0_5 = arith.constant 0 : index
    %c0_6 = arith.constant 0 : index
    %4 = vector.load %arg5[%c0_4, %c0_5, %c0_6] : memref<1x16x32xf32, #tpu.memory_space<vmem>>, vector<1x16x32xf32>
    %5 = vector.shape_cast %4 : vector<1x16x32xf32> to vector<16x32xf32>
    %6 = vector.shape_cast %3 : vector<16x32xf32> to vector<1x16x32xf32>
    tpu.vector_store %arg5[%c0_4, %c0_5, %c0_6], %6 {strides = array<i32>} : memref<1x16x32xf32, #tpu.memory_space<vmem>>, vector<1x16x32xf32>,
    %7 = arith.subf %2, %3 : vector<16x32xf32>
    %c0_7 = arith.constant 0 : index
    %c0_8 = arith.constant 0 : index
    %c0_9 = arith.constant 0 : index
    %8 = vector.load %arg4[%c0_7, %c0_8, %c0_9] : memref<1x16x32xf32, #tpu.memory_space<vmem>>, vector<1x16x32xf32>
    %9 = vector.shape_cast %8 : vector<1x16x32xf32> to vector<16x32xf32>
    %10 = vector.shape_cast %7 : vector<16x32xf32> to vector<1x16x32xf32>
    tpu.vector_store %arg4[%c0_7, %c0_8, %c0_9], %10 {strides = array<i32>} : memref<1x16x32xf32, #tpu.memory_space<vmem>>, vector<1x16x32xf32>,
    return
  }
  func.func @transform_0(%arg0: i32, %arg1: i32) -> (i32, i32) {
    %c0_i32 = arith.constant 0 : i32
    %c0_i32_0 = arith.constant 0 : i32
    %c0_i32_1 = arith.constant 0 : i32
    return %c0_i32, %c0_i32_0 : i32, i32
  }
  func.func @transform_1(%arg0: i32, %arg1: i32) -> (i32, i32, i32) {
    %c0_i32 = arith.constant 0 : i32
    %c0_i32_0 = arith.constant 0 : i32
    return %arg0, %c0_i32, %arg1 : i32, i32, i32
  }
  func.func @transform_2(%arg0: i32, %arg1: i32) -> (i32, i32, i32) {
    %c0_i32 = arith.constant 0 : i32
    %c0_i32_0 = arith.constant 0 : i32
    return %arg0, %c0_i32, %arg1 : i32, i32, i32
  }
  func.func @transform_3(%arg0: i32, %arg1: i32) -> (i32, i32, i32) {
    %c0_i32 = arith.constant 0 : i32
    %c0_i32_0 = arith.constant 0 : i32
    return %arg0, %c0_i32, %arg1 : i32, i32, i32
  }
}

</mosaic_0001>

<llo_original>
// kernel: series_decomp.1
$region0: #{series_decomp.1}
  #allocation0 [shape = 'u32[]', space=smem, size = 0x4, offset = 0x4, fixed_abs, tag = 'smem constant byte address 0x4 - core index']
  #allocation1 [shape = 'u32[72,128]{1,0:T(1,128)}', space=vmem, size = 0x9000, scoped, tag = 'internal scratch']
  %s0 = inlined_call_operand.vmem [shape: f32[16,16], index: 0, kind: input, shape index: {}]
  %s1 = inlined_call_operand.vmem [shape: f32[2,16,32], index: 1, kind: input, shape index: {}]
  %s2 = inlined_call_operand.hbm [shape: f32[2,16,32], index: 2, kind: output, shape index: {0}]
  %s3 = inlined_call_operand.hbm [shape: f32[2,16,32], index: 3, kind: output, shape index: {1}]
  %4 = xla_tuple %s2, %s3
  %s5 = sld [smem:[#allocation0]]
  $region49: #{series_decomp.1} parent=0
    _
  %s7 = ssub.s32 1, %s5
  %s8 = scalar_select 0, %s7, %s5
  $region1: #{series_decomp.1} parent=0
    #allocation2 [shape = 'u8[16384]{0}', space=vmem, size = 0x4000, scoped, tag = 'output window, operand 0']
    #allocation3 [shape = 's32[2]{0}', space=sflag, size = 0x8, scoped, tag = 'scoped memory for series_decomp.1']
    #allocation4 [shape = 'u8[16384]{0}', space=vmem, size = 0x4000, scoped, tag = 'output window, operand 1']
    #allocation5 [shape = 's32[2]{0}', space=sflag, size = 0x8, scoped, tag = 'scoped memory for series_decomp.1']
    %9 = vsyncpa [#allocation3], 0
    %s10 = scalar_lea.sflag [#allocation3], 1
    %11 = vsyncpa %s10, 0
    %12 = vsyncpa [#allocation5], 0
    %s13 = scalar_lea.sflag [#allocation5], 1
    %14 = vsyncpa %s13, 0
    loop: start=0, step=1, limit=4
    $region2: #{series_decomp.1} parent=1 // loop_pre_header
      _
    $region3: #{series_decomp.1} parent=1 // loop_header
      %s16 = sphi 0, %s20
      %p17 = scmp.ge.s32.totalorder %s16, 4
      %s23 = sphi 0, %s35
      %s24 = sphi 0, %s31
      %s25 = sphi 0, %s23
      %s26 = sphi 0, %s24
      %s27 = sphi 0, %s25
      %s28 = sphi 0, %s26
      %s36 = sphi 0, %s36
      %s38 = sphi 0, %s36
      %s39 = sphi 0, %s38
      %s53 = sphi 0, %s39
      %s61 = sphi 0, %s63
      %s64 = sphi 0, %s61
      %s65 = sphi 0, %s64
      %s81 = sphi 0, %s65
      %s89 = sphi 0, %s91
      %s92 = sphi 0, %s89
      %s93 = sphi 0, %s92
      %s109 = sphi 0, %s93
      %s117 = sphi 0, %s119
      %s120 = sphi 0, %s117
      %s121 = sphi 0, %s120
      %s137 = sphi 0, %s121
    $region4: #{series_decomp.1} parent=1 // loop_header_branch
      %19 = sbr.rel (%p17) target = $region8
    $region5: #{series_decomp.1} parent=1 // loop_body
      %s21 = ssub.s32 %s16, 1
      %s22 = ssub.s32 %s16, 2
      %s29 = sadd.s32 1, %s24
      %p30 = scmp.ge.s32.totalorder %s29, 1
      %s31 = scalar_select %p30, 0, %s29
      %s32 = sadd.s32 1, %s23
      %s33 = scalar_select %p30, %s32, %s23
      %p34 = scmp.ge.s32.totalorder %s33, 2
      %s35 = scalar_select %p34, 0, %s33
      %s37 = sadd.s32 %s36, 1
      %p40 = scmp.eq.s32.totalorder %s16, 1
      %p41 = scmp.ne.s32.totalorder %s36, %s38
      %p42 = scmp.eq.s32.totalorder %s16, 0
      %p43 = por %p41, %p42
      %p44 = scmp.ne.s32.totalorder %s36, %s38
      %p45 = scmp.eq.s32.totalorder %s21, 1
      %p46 = por %p44, %p45
      %p47 = scmp.ne.s32.totalorder %s38, %s39
      %p48 = scmp.eq.s32.totalorder %s21, 0
      %p49 = por %p47, %p48
      %p50 = scmp.ne.s32.totalorder %s38, %s39
      %p51 = scmp.eq.s32.totalorder %s22, 1
      %p52 = por %p50, %p51
      %p54 = scmp.ne.s32.totalorder %s39, %s53
      %p55 = scmp.eq.s32.totalorder %s22, 0
      %p56 = por %p54, %p55
      %s57 = ssub.s32 %s23, %s35
      %s58 = ssub.s32 %s24, %s31
      %s59 = sor.u32 %s57, %s58
      %p60 = scmp.eq.s32.totalorder %s59, 0
      %s62 = sadd.s32 %s61, 1
      %s63 = scalar_select %p60, %s61, %s62
      %p66 = pneg %p60
      %p67 = scmp.eq.s32.totalorder %s16, 1
      %p68 = por %p66, %p67
      %p69 = scmp.ne.s32.totalorder %s61, %s64
      %p70 = scmp.eq.s32.totalorder %s16, 0
      %p71 = por %p69, %p70
      %p72 = scmp.ne.s32.totalorder %s61, %s64
      %p73 = scmp.eq.s32.totalorder %s21, 1
      %p74 = por %p72, %p73
      %p75 = scmp.ne.s32.totalorder %s64, %s65
      %p76 = scmp.eq.s32.totalorder %s21, 0
      %p77 = por %p75, %p76
      %p78 = scmp.ne.s32.totalorder %s64, %s65
      %p79 = scmp.eq.s32.totalorder %s22, 1
      %p80 = por %p78, %p79
      %p82 = scmp.ne.s32.totalorder %s65, %s81
      %p83 = scmp.eq.s32.totalorder %s22, 0
      %p84 = por %p82, %p83
      %s85 = ssub.s32 %s23, %s35
      %s86 = ssub.s32 %s24, %s31
      %s87 = sor.u32 %s85, %s86
      %p88 = scmp.eq.s32.totalorder %s87, 0
      %s90 = sadd.s32 %s89, 1
      %s91 = scalar_select %p88, %s89, %s90
      %p94 = pneg %p88
      %p95 = scmp.eq.s32.totalorder %s16, 1
      %p96 = por %p94, %p95
      %p97 = scmp.ne.s32.totalorder %s89, %s92
      %p98 = scmp.eq.s32.totalorder %s16, 0
      %p99 = por %p97, %p98
      %p100 = scmp.ne.s32.totalorder %s89, %s92
      %p101 = scmp.eq.s32.totalorder %s21, 1
      %p102 = por %p100, %p101
      %p103 = scmp.ne.s32.totalorder %s92, %s93
      %p104 = scmp.eq.s32.totalorder %s21, 0
      %p105 = por %p103, %p104
      %p106 = scmp.ne.s32.totalorder %s92, %s93
      %p107 = scmp.eq.s32.totalorder %s22, 1
      %p108 = por %p106, %p107
      %p110 = scmp.ne.s32.totalorder %s93, %s109
      %p111 = scmp.eq.s32.totalorder %s22, 0
      %p112 = por %p110, %p111
      %s113 = ssub.s32 %s23, %s35
      %s114 = ssub.s32 %s24, %s31
      %s115 = sor.u32 %s113, %s114
      %p116 = scmp.eq.s32.totalorder %s115, 0
      %s118 = sadd.s32 %s117, 1
      %s119 = scalar_select %p116, %s117, %s118
      %p122 = pneg %p116
      %p123 = scmp.eq.s32.totalorder %s16, 1
      %p124 = por %p122, %p123
      %p125 = scmp.ne.s32.totalorder %s117, %s120
      %p126 = scmp.eq.s32.totalorder %s16, 0
      %p127 = por %p125, %p126
      %p128 = scmp.ne.s32.totalorder %s117, %s120
      %p129 = scmp.eq.s32.totalorder %s21, 1
      %p130 = por %p128, %p129
      %p131 = scmp.ne.s32.totalorder %s120, %s121
      %p132 = scmp.eq.s32.totalorder %s21, 0
      %p133 = por %p131, %p132
      %p134 = scmp.ne.s32.totalorder %s120, %s121
      %p135 = scmp.eq.s32.totalorder %s22, 1
      %p136 = por %p134, %p135
      %p138 = scmp.ne.s32.totalorder %s121, %s137
      %p139 = scmp.eq.s32.totalorder %s22, 0
      %p140 = por %p138, %p139
      %p141 = scmp.le.s32.totalorder 1, %s16
      %p142 = scmp.lt.s32.totalorder %s16, 3
      %p143 = pnand %p141, %p142
      %p144 = pneg %p143
      // Predicated region
      $region9: #{series_decomp.1} parent=5 // pred_check
        _
      $region10: #{series_decomp.1} parent=5 // pred_check_branch
        %146 = sbr.rel (%p143) target = $region12
      $region11: #{series_decomp.1} parent=5 // pred_region
        %s147 = ssub.s32 %s16, 1
        // Predicated region
        $region13: #{series_decomp.1} parent=11 // pred_check
          %p148 = pneg %p49
        $region14: #{series_decomp.1} parent=11 // pred_check_branch
          %150 = sbr.rel (%p148) target = $region16
        $region15: #{series_decomp.1} parent=11 // pred_region
          _
        $region16: #{series_decomp.1} parent=11 // pred_fallthru
          _
      $region12: #{series_decomp.1} parent=5 // pred_fallthru
        _
      %p151 = scmp.lt.s32.totalorder %s16, 2
      // Predicated region
      $region17: #{series_decomp.1} parent=5 // pred_check
        %p152 = pneg %p151
      $region18: #{series_decomp.1} parent=5 // pred_check_branch
        %154 = sbr.rel (%p152) target = $region20
      $region19: #{series_decomp.1} parent=5 // pred_region
        // Predicated region
        $region21: #{series_decomp.1} parent=19 // pred_check
          %p155 = pneg %p71
        $region22: #{series_decomp.1} parent=19 // pred_check_branch
          %157 = sbr.rel (%p155) target = $region24
        $region23: #{series_decomp.1} parent=19 // pred_region
          %p158 = scmp.lt.s32.totalorder %s23, 1
          %s159 = scalar_select %p158, %s23, 1
          %p160 = scmp.lt.s32.totalorder %s24, 0
          %s161 = scalar_select %p160, %s24, 0
          %s162 = smul.addr %s159, 2
          %s163 = sadd.s32 %s161, %s162
          %s164 = smul.addr %s163, 8
          %s165 = scalar_lea.vmem %s1, %s164
        $region24: #{series_decomp.1} parent=19 // pred_fallthru
          _
      $region20: #{series_decomp.1} parent=5 // pred_fallthru
        _
      %p166 = scmp.le.s32.totalorder 1, %s16
      %p167 = scmp.lt.s32.totalorder %s16, 3
      %p168 = pnand %p166, %p167
      %p169 = pneg %p168
      // Predicated region
      $region25: #{series_decomp.1} parent=5 // pred_check
        _
      $region26: #{series_decomp.1} parent=5 // pred_check_branch
        %171 = sbr.rel (%p168) target = $region28
      $region27: #{series_decomp.1} parent=5 // pred_region
        %s172 = ssub.s32 %s16, 1
        %p173 = pneg %p49
        %p174 = pneg %p46
        %p175 = scmp.lt.s32.totalorder %s25, 1
        %s176 = scalar_select %p175, %s25, 1
        %p177 = scmp.lt.s32.totalorder %s26, 0
        %s178 = scalar_select %p177, %s26, 0
        %s179 = smul.addr %s176, 2
        %s180 = sadd.s32 %s178, %s179
        %s181 = smul.addr %s180, 8
        %s182 = scalar_lea.vmem %s1, %s181
        %p183 = pneg %p77
        %p184 = pneg %p74
        %p185 = pneg %p105
        %p186 = pneg %p102
        %s187 = sand.u32 %s92, 1
        %s188 = scalar_lea.sflag [#allocation3], %s187
        %s189 = sand.u32 %s92, 1
        %s190 = smul.addr %s189, 16
        %s191 = scalar_lea.vmem [#allocation2], %s190
        %p192 = pneg %p133
        %p193 = pneg %p130
        %s194 = sand.u32 %s120, 1
        %s195 = scalar_lea.sflag [#allocation5], %s194
        %s196 = sand.u32 %s120, 1
        %s197 = smul.addr %s196, 16
        %s198 = scalar_lea.vmem [#allocation4], %s197
        %p199 = scmp.lt.s32.totalorder %s25, 1
        %s200 = scalar_select %p199, %s25, 1
        %p201 = scmp.lt.s32.totalorder %s26, 0
        %s202 = scalar_select %p201, %s26, 0
        %s203 = smul.addr %s200, 2
        %s204 = sadd.s32 %s202, %s203
        %s205 = smul.addr %s204, 8
        %s206 = scalar_lea.vmem %s1, %s205
        %v207 = vld [vmem:[%s0] sm:$0xff]
        %v208 = vld [vmem:[%s0 + $0x8] sm:$0xff]
        %v209 = vld [vmem:[%s206] sm:$0xff]
        %v210 = vld [vmem:[%s206 + $0x8] sm:$0xff]
        %vm211 = vcmask 130048
        %v213 = vsel %vm211, %v207, 0
        %v216 = vsel %vm211, %v208, 0
        %218 = vmatpush.msra.mxu0 0.0
        %219 = vmatpush.msra.mxu0 0.0
        %220 = vmatpush.msra.mxu0 0.0
        %221 = vmatpush.msra.mxu0 0.0
        %222 = vmatpush.msra.mxu0 0.0
        %223 = vmatpush.msra.mxu0 0.0
        %224 = vmatpush.msra.mxu0 0.0
        %225 = vmatpush.msra.mxu0 0.0
        %226 = vmatpush.msra.mxu0 0.0
        %227 = vmatpush.msra.mxu0 0.0
        %228 = vmatpush.msra.mxu0 0.0
        %229 = vmatpush.msra.mxu0 0.0
        %230 = vmatpush.msra.mxu0 0.0
        %231 = vmatpush.msra.mxu0 0.0
        %v232 = vand.u32 %v210, 4294901760
        %233 = vmatpush.msra.mxu0 %v232
        %v234 = vand.u32 %v209, 4294901760
        %235 = vmatpush.msra.mxu0 %v234
        %v236 = vand.u32 %v213, 4294901760
        %v237 = vsub.f32 %v213, %v236
        %v238 = vand.u32 %v237, 4294901760
        %v239 = vsub.f32 %v237, %v238
        %v240 = vand.u32 %v239, 4294901760
        %241 = vmatmul.f32.gmra.mxu0 %v240
        %v242 = vpop.f32.mrf.mxu0
        %v243 = vadd.f32 0.0, %v242
        %v244 = vand.u32 %v216, 4294901760
        %v245 = vsub.f32 %v216, %v244
        %v246 = vand.u32 %v245, 4294901760
        %v247 = vsub.f32 %v245, %v246
        %v248 = vand.u32 %v247, 4294901760
        %249 = vmatmul.f32.gmra.mxu0 %v248
        %v250 = vpop.f32.mrf.mxu0
        %v251 = vadd.f32 0.0, %v250
        %252 = vdwg.mxu0
        %253 = vmatpush.msra.mxu0 0.0
        %254 = vmatpush.msra.mxu0 0.0
        %255 = vmatpush.msra.mxu0 0.0
        %256 = vmatpush.msra.mxu0 0.0
        %257 = vmatpush.msra.mxu0 0.0
        %258 = vmatpush.msra.mxu0 0.0
        %259 = vmatpush.msra.mxu0 0.0
        %260 = vmatpush.msra.mxu0 0.0
        %261 = vmatpush.msra.mxu0 0.0
        %262 = vmatpush.msra.mxu0 0.0
        %263 = vmatpush.msra.mxu0 0.0
        %264 = vmatpush.msra.mxu0 0.0
        %265 = vmatpush.msra.mxu0 0.0
        %266 = vmatpush.msra.mxu0 0.0
        %v267 = vand.u32 %v210, 4294901760
        %v268 = vsub.f32 %v210, %v267
        %v269 = vand.u32 %v268, 4294901760
        %v270 = vsub.f32 %v268, %v269
        %v271 = vand.u32 %v270, 4294901760
        %272 = vmatpush.msra.mxu0 %v271
        %v273 = vand.u32 %v209, 4294901760
        %v274 = vsub.f32 %v209, %v273
        %v275 = vand.u32 %v274, 4294901760
        %v276 = vsub.f32 %v274, %v275
        %v277 = vand.u32 %v276, 4294901760
        %278 = vmatpush.msra.mxu0 %v277
        %v279 = vand.u32 %v213, 4294901760
        %280 = vmatmul.f32.gmra.mxu0 %v279
        %v281 = vpop.f32.mrf.mxu0
        %v282 = vadd.f32 %v243, %v281
        %v283 = vand.u32 %v216, 4294901760
        %284 = vmatmul.f32.gmra.mxu0 %v283
        %v285 = vpop.f32.mrf.mxu0
        %v286 = vadd.f32 %v251, %v285
        %287 = vdwg.mxu0
        %288 = vmatpush.msra.mxu0 0.0
        %289 = vmatpush.msra.mxu0 0.0
        %290 = vmatpush.msra.mxu0 0.0
        %291 = vmatpush.msra.mxu0 0.0
        %292 = vmatpush.msra.mxu0 0.0
        %293 = vmatpush.msra.mxu0 0.0
        %294 = vmatpush.msra.mxu0 0.0
        %295 = vmatpush.msra.mxu0 0.0
        %296 = vmatpush.msra.mxu0 0.0
        %297 = vmatpush.msra.mxu0 0.0
        %298 = vmatpush.msra.mxu0 0.0
        %299 = vmatpush.msra.mxu0 0.0
        %300 = vmatpush.msra.mxu0 0.0
        %301 = vmatpush.msra.mxu0 0.0
        %v302 = vand.u32 %v210, 4294901760
        %v303 = vsub.f32 %v210, %v302
        %304 = vmatpush.msra.mxu0 %v303
        %v305 = vand.u32 %v209, 4294901760
        %v306 = vsub.f32 %v209, %v305
        %307 = vmatpush.msra.mxu0 %v306
        %v308 = vand.u32 %v213, 4294901760
        %v309 = vsub.f32 %v213, %v308
        %310 = vmatmul.f32.gmra.mxu0 %v309
        %v311 = vpop.f32.mrf.mxu0
        %v312 = vadd.f32 %v282, %v311
        %v313 = vand.u32 %v216, 4294901760
        %v314 = vsub.f32 %v216, %v313
        %315 = vmatmul.f32.gmra.mxu0 %v314
        %v316 = vpop.f32.mrf.mxu0
        %v317 = vadd.f32 %v286, %v316
        %318 = vdwg.mxu0
        %319 = vmatpush.msra.mxu0 0.0
        %320 = vmatpush.msra.mxu0 0.0
        %321 = vmatpush.msra.mxu0 0.0
        %322 = vmatpush.msra.mxu0 0.0
        %323 = vmatpush.msra.mxu0 0.0
        %324 = vmatpush.msra.mxu0 0.0
        %325 = vmatpush.msra.mxu0 0.0
        %326 = vmatpush.msra.mxu0 0.0
        %327 = vmatpush.msra.mxu0 0.0
        %328 = vmatpush.msra.mxu0 0.0
        %329 = vmatpush.msra.mxu0 0.0
        %330 = vmatpush.msra.mxu0 0.0
        %331 = vmatpush.msra.mxu0 0.0
        %332 = vmatpush.msra.mxu0 0.0
        %v333 = vand.u32 %v210, 4294901760
        %334 = vmatpush.msra.mxu0 %v333
        %v335 = vand.u32 %v209, 4294901760
        %336 = vmatpush.msra.mxu0 %v335
        %v337 = vand.u32 %v213, 4294901760
        %v338 = vsub.f32 %v213, %v337
        %v339 = vand.u32 %v338, 4294901760
        %340 = vmatmul.f32.gmra.mxu0 %v339
        %v341 = vpop.f32.mrf.mxu0
        %v342 = vadd.f32 %v312, %v341
        %v343 = vand.u32 %v216, 4294901760
        %v344 = vsub.f32 %v216, %v343
        %v345 = vand.u32 %v344, 4294901760
        %346 = vmatmul.f32.gmra.mxu0 %v345
        %v347 = vpop.f32.mrf.mxu0
        %v348 = vadd.f32 %v317, %v347
        %349 = vdwg.mxu0
        %350 = vmatpush.msra.mxu0 0.0
        %351 = vmatpush.msra.mxu0 0.0
        %352 = vmatpush.msra.mxu0 0.0
        %353 = vmatpush.msra.mxu0 0.0
        %354 = vmatpush.msra.mxu0 0.0
        %355 = vmatpush.msra.mxu0 0.0
        %356 = vmatpush.msra.mxu0 0.0
        %357 = vmatpush.msra.mxu0 0.0
        %358 = vmatpush.msra.mxu0 0.0
        %359 = vmatpush.msra.mxu0 0.0
        %360 = vmatpush.msra.mxu0 0.0
        %361 = vmatpush.msra.mxu0 0.0
        %362 = vmatpush.msra.mxu0 0.0
        %363 = vmatpush.msra.mxu0 0.0
        %v364 = vand.u32 %v210, 4294901760
        %v365 = vsub.f32 %v210, %v364
        %v366 = vand.u32 %v365, 4294901760
        %367 = vmatpush.msra.mxu0 %v366
        %v368 = vand.u32 %v209, 4294901760
        %v369 = vsub.f32 %v209, %v368
        %v370 = vand.u32 %v369, 4294901760
        %371 = vmatpush.msra.mxu0 %v370
        %v372 = vand.u32 %v213, 4294901760
        %373 = vmatmul.f32.gmra.mxu0 %v372
        %v374 = vpop.f32.mrf.mxu0
        %v375 = vadd.f32 %v342, %v374
        %v376 = vand.u32 %v216, 4294901760
        %377 = vmatmul.f32.gmra.mxu0 %v376
        %v378 = vpop.f32.mrf.mxu0
        %v379 = vadd.f32 %v348, %v378
        %380 = vdwg.mxu0
        %381 = vmatpush.msra.mxu0 0.0
        %382 = vmatpush.msra.mxu0 0.0
        %383 = vmatpush.msra.mxu0 0.0
        %384 = vmatpush.msra.mxu0 0.0
        %385 = vmatpush.msra.mxu0 0.0
        %386 = vmatpush.msra.mxu0 0.0
        %387 = vmatpush.msra.mxu0 0.0
        %388 = vmatpush.msra.mxu0 0.0
        %389 = vmatpush.msra.mxu0 0.0
        %390 = vmatpush.msra.mxu0 0.0
        %391 = vmatpush.msra.mxu0 0.0
        %392 = vmatpush.msra.mxu0 0.0
        %393 = vmatpush.msra.mxu0 0.0
        %394 = vmatpush.msra.mxu0 0.0
        %v395 = vand.u32 %v210, 4294901760
        %396 = vmatpush.msra.mxu0 %v395
        %v397 = vand.u32 %v209, 4294901760
        %398 = vmatpush.msra.mxu0 %v397
        %v399 = vand.u32 %v213, 4294901760
        %400 = vmatmul.f32.gmra.mxu0 %v399
        %v401 = vpop.f32.mrf.mxu0
        %v402 = vadd.f32 %v375, %v401
        %v403 = vand.u32 %v216, 4294901760
        %404 = vmatmul.f32.gmra.mxu0 %v403
        %v405 = vpop.f32.mrf.mxu0
        %v406 = vadd.f32 %v379, %v405
        %407 = vdwg.mxu0
        %vm408 = vcmask 261120
        %409 = vst.msk [vmem:[%s198] sm:$0xff] %vm408, %v402
        %410 = vst.msk [vmem:[%s198 + $0x8] sm:$0xff] %vm408, %v406
        %v411 = vsub.f32 %v209, %v402
        %v412 = vsub.f32 %v210, %v406
        %413 = vst.msk [vmem:[%s191] sm:$0xff] %vm408, %v411
        %414 = vst.msk [vmem:[%s191 + $0x8] sm:$0xff] %vm408, %v412
        %s415 = sand.u32 %s92, 1
        %s416 = scalar_lea.sflag [#allocation3], %s415
        %s417 = sand.u32 %s92, 1
        %s418 = smul.addr %s417, 16
        %s419 = scalar_lea.vmem [#allocation2], %s418
        %s420 = sand.u32 %s120, 1
        %s421 = scalar_lea.sflag [#allocation5], %s420
        %s422 = sand.u32 %s120, 1
        %s423 = smul.addr %s422, 16
        %s424 = scalar_lea.vmem [#allocation4], %s423
        // Predicated region
        $region29: #{series_decomp.1} parent=27 // pred_check
          %p425 = pneg %p102
        $region30: #{series_decomp.1} parent=27 // pred_check_branch
          %427 = sbr.rel (%p425) target = $region32
        $region31: #{series_decomp.1} parent=27 // pred_region
          %429 = vsyncadd %s416, 0
          %s430 = smul.addr %s25, 2
          %s431 = sadd.s32 %s26, %s430
          %s432 = smul.addr %s431, 8
          %s433 = scalar_lea.hbm %s2, %s432
          %s434 = sshll.u32 %s419, 4
          %s435 = int_to_ptr.vmem [resolvable:$true] %s434
          %s436 = sshll.u32 %s433, 4
          %s437 = int_to_ptr.hbm [resolvable:$true] %s436
          %442 = dma.vmem_to_hbm [thread:$0]  %s435, 256, %s437, %s416, 128, 128, 8
        $region32: #{series_decomp.1} parent=27 // pred_fallthru
          _
        // Predicated region
        $region33: #{series_decomp.1} parent=27 // pred_check
          %p443 = pneg %p130
        $region34: #{series_decomp.1} parent=27 // pred_check_branch
          %445 = sbr.rel (%p443) target = $region36
        $region35: #{series_decomp.1} parent=27 // pred_region
          %447 = vsyncadd %s421, 0
          %s448 = smul.addr %s25, 2
          %s449 = sadd.s32 %s26, %s448
          %s450 = smul.addr %s449, 8
          %s451 = scalar_lea.hbm %s3, %s450
          %s452 = sshll.u32 %s424, 4
          %s453 = int_to_ptr.vmem [resolvable:$true] %s452
          %s454 = sshll.u32 %s451, 4
          %s455 = int_to_ptr.hbm [resolvable:$true] %s454
          %460 = dma.vmem_to_hbm [thread:$0]  %s453, 256, %s455, %s421, 128, 128, 8
        $region36: #{series_decomp.1} parent=27 // pred_fallthru
          _
      $region28: #{series_decomp.1} parent=5 // pred_fallthru
        _
      %p461 = scmp.le.s32.totalorder 2, %s16
      // Predicated region
      $region37: #{series_decomp.1} parent=5 // pred_check
        %p462 = pneg %p461
      $region38: #{series_decomp.1} parent=5 // pred_check_branch
        %464 = sbr.rel (%p462) target = $region40
      $region39: #{series_decomp.1} parent=5 // pred_region
        %s465 = ssub.s32 %s16, 2
        // Predicated region
        $region41: #{series_decomp.1} parent=39 // pred_check
          %p466 = pneg %p108
        $region42: #{series_decomp.1} parent=39 // pred_check_branch
          %468 = sbr.rel (%p466) target = $region44
        $region43: #{series_decomp.1} parent=39 // pred_region
          %s469 = sand.u32 %s93, 1
          %s470 = scalar_lea.sflag [#allocation3], %s469
          %s471 = sand.u32 %s93, 1
          %s472 = smul.addr %s471, 16
          %s473 = scalar_lea.vmem [#allocation2], %s472
          %475 = dma.done %s470, 256
        $region44: #{series_decomp.1} parent=39 // pred_fallthru
          _
        // Predicated region
        $region45: #{series_decomp.1} parent=39 // pred_check
          %p476 = pneg %p136
        $region46: #{series_decomp.1} parent=39 // pred_check_branch
          %478 = sbr.rel (%p476) target = $region48
        $region47: #{series_decomp.1} parent=39 // pred_region
          %s479 = sand.u32 %s121, 1
          %s480 = scalar_lea.sflag [#allocation5], %s479
          %s481 = sand.u32 %s121, 1
          %s482 = smul.addr %s481, 16
          %s483 = scalar_lea.vmem [#allocation4], %s482
          %485 = dma.done %s480, 256
        $region48: #{series_decomp.1} parent=39 // pred_fallthru
          _
      $region40: #{series_decomp.1} parent=5 // pred_fallthru
        _
    $region6: #{series_decomp.1} parent=1 // loop_footer
      %s20 = sadd.s32 1, %s16
    $region7: #{series_decomp.1} parent=1 // loop_footer_branch
      %15 = sbr.rel target = $region3
    $region8: #{series_decomp.1} parent=1 // loop_exit
      _
    %486 = vsyncpa [#allocation3], 1
    %s487 = scalar_lea.sflag [#allocation3], 1
    %488 = vsyncpa %s487, 1
    %489 = vsyncpa [#allocation5], 1
    %s490 = scalar_lea.sflag [#allocation5], 1
    %491 = vsyncpa %s490, 1

</llo_original>
